<compile_context>
chip_gen: v7x
topology: tpu7x:2x2x1
jax: 0.10.0
libtpu: 0.0.40
codegen_flags: <defaults>
</compile_context>

<pallas_src>
import jax
import jax.numpy as jnp
from jax.experimental import pallas as pl
from jax.experimental.pallas import tpu as pltpu

HIDDEN = 26    # hard-coded in the PyTorch module
LANE = 128     # TPU lane width
TB_MAX = 4096  # batch-tile row cap


def _round_up(a, b):
    return ((a + b - 1) // b) * b


# ---------------------------------------------------------------------------
# Kernel: one batch tile of the collapsed affine map  y = x @ Wc + bc
# ---------------------------------------------------------------------------
def affine_kernel(x_ref, w_ref, b_ref, o_ref):
    acc = jnp.dot(x_ref[...], w_ref[...], preferred_element_type=jnp.float32)
    o_ref[...] = (acc + b_ref[...]).astype(o_ref.dtype)


# ---------------------------------------------------------------------------
# Param init (PyTorch nn.Linear default init; weights stored [fan_in, fan_out])
# ---------------------------------------------------------------------------
def init_params(key, input_size, output_size):
    ks = jax.random.split(key, 6)

    def lin(kw, kb, fan_in, fan_out):
        bound = 1.0 / jnp.sqrt(jnp.float32(fan_in))
        w = jax.random.uniform(kw, (fan_in, fan_out), jnp.float32, -bound, bound)
        b = jax.random.uniform(kb, (1, fan_out), jnp.float32, -bound, bound)
        return w, b

    w1, b1 = lin(ks[0], ks[1], input_size, HIDDEN)
    w2, b2 = lin(ks[2], ks[3], HIDDEN, HIDDEN)
    w3, b3 = lin(ks[4], ks[5], HIDDEN, output_size)
    return {"w1": w1, "b1": b1, "w2": w2, "b2": b2, "w3": w3, "b3": b3}


# ---------------------------------------------------------------------------
# One-time fold of the three affine layers (done at init, NOT per forward).
# Output lane-padding is conditional: narrow outputs keep their true width
# (masked store << 8x HBM writeback + extra slice pass); only pad when the
# waste is <= 12.5% of the true width.
# ---------------------------------------------------------------------------
def fold_and_pad_params(params, dtype=jnp.float32):
    w1, b1 = params["w1"], params["b1"]
    w2, b2 = params["w2"], params["b2"]
    w3, b3 = params["w3"], params["b3"]

    # No nonlinearity between layers -> single affine map (folded in f32).
    wc = w1 @ w2 @ w3                       # [input_size, output_size]
    bc = b1 @ w2 @ w3 + b2 @ w3 + b3        # [1, output_size]

    out_features = wc.shape[1]
    pad_to = _round_up(out_features, LANE)
    if pad_to != out_features and (pad_to - out_features) * 8 > out_features:
        pad_to = out_features               # narrow output: skip lane padding
    if pad_to != out_features:
        wc = jnp.pad(wc, ((0, 0), (0, pad_to - out_features)))
        bc = jnp.pad(bc, ((0, 0), (0, pad_to - out_features)))

    return {"wc": wc.astype(dtype), "bc": bc.astype(dtype),
            "out_features": out_features}


# ---------------------------------------------------------------------------
# Batch tile selection: (tile_rows, padded_batch)
#   1. prefer a tile that divides batch exactly (no jnp.pad / output slice),
#      is a multiple of 8, and gives >= 2 grid steps when batch >= 16 so
#      v7x's 2 TensorCores are both used,
#   2. else a single full-batch tile (block == full dim, no padding at all),
#   3. else (batch > TB_MAX, no aligned divisor) pad batch up to a tile
#      multiple.
# ---------------------------------------------------------------------------
def _choose_batch_tile(batch, tb_max=TB_MAX):
    want_grid = 2 if batch >= 16 else 1
    cap = min(tb_max, -(-batch // want_grid))
    for tb in range(min(cap, batch), 7, -1):
        if batch % tb == 0 and tb % 8 == 0:
            return tb, batch
    if batch <= tb_max:
        return batch, batch
    tb = min(_round_up(cap, 8), tb_max)
    return tb, _round_up(batch, tb)


def _vmem_limit_bytes():
    # Generation-aware scoped-VMEM limit: ~48 MiB on v7x (64 MiB physical),
    # ~96 MiB on v5e/v6e (128 MiB physical). Fallback assumes the smaller chip.
    cap = None
    try:
        cap = getattr(pltpu.get_tpu_info(), "vmem_capacity_bytes", None)
    except Exception:
        cap = None
    if not cap:
        cap = 64 * 1024 * 1024
    return (48 if cap <= 64 * 1024 * 1024 else 96) * 1024 * 1024


# ---------------------------------------------------------------------------
# Forward: batch-tiled pallas_call over the folded params
# ---------------------------------------------------------------------------
def basic_net_forward(x, folded, tb_max=TB_MAX):
    wc, bc = folded["wc"], folded["bc"]
    out_features = folded["out_features"]
    n_out = wc.shape[1]

    batch, k = x.shape
    if x.dtype != wc.dtype:
        x = x.astype(wc.dtype)   # bf16 streaming halves HBM bytes when enabled

    tb, padded_batch = _choose_batch_tile(batch, tb_max)
    if padded_batch != batch:
        x = jnp.pad(x, ((0, padded_batch - batch), (0, 0)))

    grid = (padded_batch // tb,)

    out = pl.pallas_call(
        affine_kernel,
        out_shape=jax.ShapeDtypeStruct((padded_batch, n_out), wc.dtype),
        grid=grid,
        in_specs=[
            pl.BlockSpec((tb, k), lambda i: (i, 0)),      # x tile (pipelined)
            # Wc / bc: constant index_map -> resident in VMEM across steps.
            # (pipeline_mode=pl.Buffered(1) would drop their second buffer,
            #  but at K=32 they are ~16 KiB, so the extra knob buys nothing.)
            pl.BlockSpec((k, n_out), lambda i: (0, 0)),
            pl.BlockSpec((1, n_out), lambda i: (0, 0)),
        ],
        out_specs=pl.BlockSpec((tb, n_out), lambda i: (i, 0)),
        compiler_params=pltpu.CompilerParams(
            dimension_semantics=("parallel",),            # shard batch on v7x's 2 TCs
            vmem_limit_bytes=_vmem_limit_bytes(),
        ),
    )(x, wc, bc)

    # TODO(synk): if input_size grows into the thousands, add a K reduction
    # grid axis ("arbitrary") with an f32 VMEM accumulator instead of loading
    # the full (K, n_out) Wc block per step.

    if padded_batch != batch or n_out != out_features:
        out = out[:batch, :out_features]
    return out


if __name__ == "__main__":
    input_size, output_size = 32, 16

    key = jax.random.PRNGKey(0)
    k_x, k_p = jax.random.split(key)
    params = init_params(k_p, input_size, output_size)

    def reference(xv):  # plain-JAX sequential 3-layer forward (== PyTorch module)
        r = xv
        for wname, bname in (("w1", "b1"), ("w2", "b2"), ("w3", "b3")):
            r = r @ params[wname] + params[bname]
        return r

    # f32 path, small batch: single 8-row tile, no padding / slicing anywhere.
    folded_f32 = fold_and_pad_params(params, dtype=jnp.float32)
    x8 = jax.random.normal(k_x, (8, input_size), jnp.float32)
    out8 = basic_net_forward(x8, folded_f32)
    jax.block_until_ready(out8)
    assert out8.shape == (8, output_size)
    assert jnp.allclose(out8, reference(x8), atol=1e-4, rtol=1e-4)

    # f32 path, batch that splits into >= 2 grid steps (exercises pipelining
    # and the exact-divisor tile chooser: batch=48 -> tile=24, grid=(2,)).
    x48 = jax.random.normal(k_x, (48, input_size), jnp.float32)
    out48 = basic_net_forward(x48, folded_f32)
    jax.block_until_ready(out48)
    assert out48.shape == (48, output_size)
    assert jnp.allclose(out48, reference(x48), atol=1e-4, rtol=1e-4)

    # bf16 streaming path (f32 MXU accumulation), looser tolerance.
    folded_bf16 = fold_and_pad_params(params, dtype=jnp.bfloat16)
    out_bf16 = basic_net_forward(x8, folded_bf16)
    jax.block_until_ready(out_bf16)
    assert out_bf16.shape == (8, output_size)
    assert jnp.allclose(out_bf16.astype(jnp.float32), reference(x8),
                        atol=2e-2, rtol=2e-2)

    print("KERNEL_OK")
</pallas_src>

<mosaic_0001>
module attributes {stable_mosaic.version = 11 : i64} {
  func.func @affine_kernel(%arg0: i32, %arg1: memref<8x32xf32, #tpu.memory_space<vmem>>, %arg2: memref<32x16xf32, #tpu.memory_space<vmem>>, %arg3: memref<1x16xf32, #tpu.memory_space<vmem>>, %arg4: memref<8x16xf32, #tpu.memory_space<vmem>>) attributes {dimension_semantics = [#tpu.dimension_semantics<parallel>], iteration_bounds = array<i64: 1>, scalar_prefetch = 0 : i64, scratch_operands = 0 : i64, tpu.core_type = #tpu.core_type<tc>, window_params = [{transform_indices = @transform_0, window_bounds = array<i64: 8, 32>}, {pipeline_mode = #tpu.pipeline_mode<synchronous>, transform_indices = @transform_1, window_bounds = array<i64: 32, 16>}, {pipeline_mode = #tpu.pipeline_mode<synchronous>, transform_indices = @transform_2, window_bounds = array<i64: 1, 16>}, {transform_indices = @transform_3, window_bounds = array<i64: 8, 16>}]} {
    %c0 = arith.constant 0 : index
    %c0_0 = arith.constant 0 : index
    %0 = vector.load %arg1[%c0, %c0_0] : memref<8x32xf32, #tpu.memory_space<vmem>>, vector<8x32xf32>
    %c0_1 = arith.constant 0 : index
    %c0_2 = arith.constant 0 : index
    %1 = vector.load %arg2[%c0_1, %c0_2] : memref<32x16xf32, #tpu.memory_space<vmem>>, vector<32x16xf32>
    %cst = arith.constant dense<0.000000e+00> : vector<8x16xf32>
    %2 = tpu.matmul %0, %1, %cst {dimension_numbers = #tpu.dot_dimension_numbers<[1], [0], [0], [1], [0, 0, 1, 1], [], []>} : vector<8x32xf32>, vector<32x16xf32>, vector<8x16xf32> -> vector<8x16xf32>
    %c0_3 = arith.constant 0 : index
    %c0_4 = arith.constant 0 : index
    %3 = vector.load %arg3[%c0_3, %c0_4] : memref<1x16xf32, #tpu.memory_space<vmem>>, vector<1x16xf32>
    %4 = vector.broadcast %3 : vector<1x16xf32> to vector<8x16xf32>
    %5 = arith.addf %2, %4 : vector<8x16xf32>
    %c0_5 = arith.constant 0 : index
    %c0_6 = arith.constant 0 : index
    %6 = vector.load %arg4[%c0_5, %c0_6] : memref<8x16xf32, #tpu.memory_space<vmem>>, vector<8x16xf32>
    tpu.vector_store %arg4[%c0_5, %c0_6], %5 {strides = array<i32>} : memref<8x16xf32, #tpu.memory_space<vmem>>, vector<8x16xf32>,
    return
  }
  func.func @transform_0(%arg0: i32) -> (i32, i32) {
    %c0_i32 = arith.constant 0 : i32
    %c0_i32_0 = arith.constant 0 : i32
    return %arg0, %c0_i32 : i32, i32
  }
  func.func @transform_1(%arg0: i32) -> (i32, i32) {
    %c0_i32 = arith.constant 0 : i32
    %c0_i32_0 = arith.constant 0 : i32
    %c0_i32_1 = arith.constant 0 : i32
    return %c0_i32, %c0_i32_0 : i32, i32
  }
  func.func @transform_2(%arg0: i32) -> (i32, i32) {
    %c0_i32 = arith.constant 0 : i32
    %c0_i32_0 = arith.constant 0 : i32
    %c0_i32_1 = arith.constant 0 : i32
    return %c0_i32, %c0_i32_0 : i32, i32
  }
  func.func @transform_3(%arg0: i32) -> (i32, i32) {
    %c0_i32 = arith.constant 0 : i32
    %c0_i32_0 = arith.constant 0 : i32
    return %arg0, %c0_i32 : i32, i32
  }
}

</mosaic_0001>

<llo_original>
// kernel: tpu_custom_call.1
$region0: #{tpu_custom_call.1}
  #allocation0 [shape = 'u32[]', space=smem, size = 0x4, offset = 0x4, fixed_abs, tag = 'smem constant byte address 0x4 - core index']
  #allocation1 [shape = 'u32[144,128]{1,0:T(1,128)}', space=vmem, size = 0x12000, scoped, tag = 'internal scratch']
  %s0 = inlined_call_operand.vmem [shape: f32[8,32], index: 0, kind: input, shape index: {}]
  %s1 = inlined_call_operand.vmem [shape: f32[32,16], index: 1, kind: input, shape index: {}]
  %s2 = inlined_call_operand.vmem [shape: f32[1,16], index: 2, kind: input, shape index: {}]
  %s3 = inlined_call_operand.hbm [shape: f32[8,16], index: 3, kind: output, shape index: {}]
  %s4 = sld [smem:[#allocation0]]
  $region22: #{tpu_custom_call.1} parent=0
    _
  %s6 = ssub.s32 1, %s4
  %s7 = scalar_select 0, %s6, %s4
  $region1: #{tpu_custom_call.1} parent=0
    #allocation2 [shape = 'u8[4096]{0}', space=vmem, size = 0x1000, scoped, tag = 'output window, operand 0, single buffered']
    #allocation3 [shape = 's32[1]{0}', space=sflag, size = 0x4, scoped, tag = 'scoped memory for tpu_custom_call.1']
    %8 = vsyncpa [#allocation3], 0
    // Predicated region
    $region2: #{tpu_custom_call.1} parent=1 // pred_check
      _
    $region3: #{tpu_custom_call.1} parent=1 // pred_check_branch
      %10 = sbr.rel (0) target = $region5
    $region4: #{tpu_custom_call.1} parent=1 // pred_region
      _
    $region5: #{tpu_custom_call.1} parent=1 // pred_fallthru
      _
    // Predicated region
    $region6: #{tpu_custom_call.1} parent=1 // pred_check
      _
    $region7: #{tpu_custom_call.1} parent=1 // pred_check_branch
      %12 = sbr.rel (0) target = $region9
    $region8: #{tpu_custom_call.1} parent=1 // pred_region
      _
    $region9: #{tpu_custom_call.1} parent=1 // pred_fallthru
      _
    // Predicated region
    $region10: #{tpu_custom_call.1} parent=1 // pred_check
      _
    $region11: #{tpu_custom_call.1} parent=1 // pred_check_branch
      %14 = sbr.rel (0) target = $region13
    $region12: #{tpu_custom_call.1} parent=1 // pred_region
      _
    $region13: #{tpu_custom_call.1} parent=1 // pred_fallthru
      _
    %v15 = vld [vmem:[%s0] sm:$0xff]
    %v16 = vld [vmem:[%s1] sm:$0xff]
    %v17 = vld [vmem:[%s1 + $0x8] sm:$0xff]
    %v18 = vld [vmem:[%s1 + $0x10] sm:$0xff]
    %v19 = vld [vmem:[%s1 + $0x18] sm:$0xff]
    %v20 = vld [vmem:[%s2] sm:$0x1]
    %v22 = vlaneseq
    %v23 = vshrl.u32 %v22, 7
    %v24 = vsub.s32 0, %v23
    %v25 = vrot.slane %v20, %v24
    %vm27 = vcmask 261120
    %v29 = vsel %vm27, %v15, 0
    %31 = vmatprep.subr.mxu0 0.0
    %32 = vmatpush1.msra.mxu0 %v16
    %33 = vmatprep.subr.mxu0 0.0
    %34 = vmatpush1.msra.mxu0 %v17
    %35 = vmatprep.subr.mxu0 0.0
    %36 = vmatpush1.msra.mxu0 %v18
    %37 = vmatprep.subr.mxu0 0.0
    %38 = vmatpush1.msra.mxu0 %v19
    %39 = vmatprep.subr.mxu0 0.0
    %40 = vmatpush1.msra.mxu0 0.0
    %41 = vmatprep.subr.mxu0 0.0
    %42 = vmatpush1.msra.mxu0 0.0
    %43 = vmatprep.subr.mxu0 0.0
    %44 = vmatpush1.msra.mxu0 0.0
    %45 = vmatprep.subr.mxu0 0.0
    %46 = vmatpush1.msra.mxu0 0.0
    %47 = vmatprep.subr.mxu0 0.0
    %48 = vmatpush1.msra.mxu0 0.0
    %49 = vmatprep.subr.mxu0 0.0
    %50 = vmatpush1.msra.mxu0 0.0
    %51 = vmatprep.subr.mxu0 0.0
    %52 = vmatpush1.msra.mxu0 0.0
    %53 = vmatprep.subr.mxu0 0.0
    %54 = vmatpush1.msra.mxu0 0.0
    %55 = vmatprep.subr.mxu0 0.0
    %56 = vmatpush1.msra.mxu0 0.0
    %57 = vmatprep.subr.mxu0 0.0
    %58 = vmatpush1.msra.mxu0 0.0
    %59 = vmatprep.subr.mxu0 0.0
    %60 = vmatpush1.msra.mxu0 0.0
    %61 = vmatprep.subr.mxu0 0.0
    %62 = vmatpush1.msra.mxu0 0.0
    %63 = vmatprep.subr.mxu0 0.0
    %64 = vmatpush1.msra.mxu0 0.0
    %65 = vmatprep.subr.mxu0 0.0
    %66 = vmatpush1.msra.mxu0 0.0
    %67 = vmatprep.subr.mxu0 0.0
    %68 = vmatpush1.msra.mxu0 0.0
    %69 = vmatprep.subr.mxu0 0.0
    %70 = vmatpush1.msra.mxu0 0.0
    %71 = vmatprep.subr.mxu0 0.0
    %72 = vmatpush1.msra.mxu0 0.0
    %73 = vmatprep.subr.mxu0 0.0
    %74 = vmatpush1.msra.mxu0 0.0
    %75 = vmatprep.subr.mxu0 0.0
    %76 = vmatpush1.msra.mxu0 0.0
    %77 = vmatprep.subr.mxu0 0.0
    %78 = vmatpush1.msra.mxu0 0.0
    %79 = vmatprep.subr.mxu0 0.0
    %80 = vmatpush1.msra.mxu0 0.0
    %81 = vmatprep.subr.mxu0 0.0
    %82 = vmatpush1.msra.mxu0 0.0
    %83 = vmatprep.subr.mxu0 0.0
    %84 = vmatpush1.msra.mxu0 0.0
    %85 = vmatprep.subr.mxu0 0.0
    %86 = vmatpush1.msra.mxu0 0.0
    %87 = vmatprep.subr.mxu0 0.0
    %88 = vmatpush1.msra.mxu0 0.0
    %89 = vmatprep.subr.mxu0 0.0
    %90 = vmatpush1.msra.mxu0 0.0
    %91 = vmatprep.subr.mxu0 0.0
    %92 = vmatpush1.msra.mxu0 0.0
    %93 = vmatprep.subr.mxu0 0.0
    %94 = vmatpush1.msra.mxu0 0.0
    %95 = vmatprep.mubr.f32.mxu0 0.0
    %96 = vmatmul.mubr.f32.gmra.mrb[0].mxu0 %v29
    %v97 = vpop.f32.mrb[0].mxu0
    %v98 = vadd.f32 %v25, %v97
    %v99 = vpop.f32.mrb[0].mxu0
    %100 = vdwg.mxu0
    %vm101 = vcmask 130048
    %102 = vst.msk [vmem:[#allocation2] sm:$0xff] %vm101, %v98
    // Predicated region
    $region14: #{tpu_custom_call.1} parent=1 // pred_check
      _
    $region15: #{tpu_custom_call.1} parent=1 // pred_check_branch
      %104 = sbr.rel (0) target = $region17
    $region16: #{tpu_custom_call.1} parent=1 // pred_region
      %s106 = ssub.s32 128, 128
      %107 = vsyncadd [#allocation3], %s106
      %s109 = sshll.u32 [#allocation2], 4
      %s110 = int_to_ptr.vmem [resolvable:$true] %s109
      %112 = dma.vmem_to_hbm [thread:$0]  %s110, 128, %s3, [#allocation3]
    $region17: #{tpu_custom_call.1} parent=1 // pred_fallthru
      _
    // Predicated region
    $region18: #{tpu_custom_call.1} parent=1 // pred_check
      _
    $region19: #{tpu_custom_call.1} parent=1 // pred_check_branch
      %114 = sbr.rel (0) target = $region21
    $region20: #{tpu_custom_call.1} parent=1 // pred_region
      %115 = dma.done [#allocation3], 128
    $region21: #{tpu_custom_call.1} parent=1 // pred_fallthru
      _
    %116 = vsyncpa [#allocation3], 1

</llo_original>
